<compile_context>
chip_gen: v6e
topology: v6e:2x2x1
jax: 0.10.0
libtpu: 0.0.40
codegen_flags: <defaults>
</compile_context>

<pallas_src>
import functools

import jax
import jax.numpy as jnp
from jax.experimental import pallas as pl
from jax.experimental.pallas import tpu as pltpu


def _round_up(x, m):
    return (x + m - 1) // m * m


def _cls_fused_loss_kernel(ya_ref, yt_ref, wa_ref, wt_ref, lbl_ref, out_ref,
                           *, num_classes):
    labels = lbl_ref[...]                               # (TB, 1) int32, -1 = padded row
    valid = (labels >= 0).astype(jnp.float32)           # (TB, 1) masks padded rows

    def head_ce_sum(x_ref, w_ref):
        # Plain (M, K) x (K, Cp) matmul: bf16 in, f32 accumulate on the MXU.
        logits = jnp.dot(x_ref[...], w_ref[...],
                         preferred_element_type=jnp.float32)        # (TB, Cp) f32
        tb, cp = logits.shape
        class_ids = jax.lax.broadcasted_iota(jnp.int32, (tb, cp), 1)
        # Mask padded class columns so max / LSE match the unpadded problem.
        logits = jnp.where(class_ids < num_classes, logits, -jnp.inf)
        m = jnp.max(logits, axis=-1, keepdims=True)                  # (TB, 1)
        lse = jnp.log(jnp.sum(jnp.exp(logits - m), axis=-1, keepdims=True)) + m
        # select (not one-hot multiply) so -inf padded columns never hit 0*inf.
        tgt = jnp.sum(jnp.where(class_ids == labels, logits, 0.0),
                      axis=-1, keepdims=True)                        # (TB, 1)
        return jnp.sum((lse - tgt) * valid)

    # Per-tile UNNORMALIZED partial; the single divide by B happens in the wrapper.
    out_ref[0, 0] = head_ce_sum(ya_ref, wa_ref) + head_ce_sum(yt_ref, wt_ref)


def cls_fused_loss(y_embed_audio, y_embed_text, y_true, fused_weight, pos,
                   *, batch_tile=256, compute_dtype=jnp.bfloat16):
    """loss = CE(audio @ W[:, :pos].T, y) + CE(text @ W[:, pos:].T, y), mean reduction."""
    B, d_audio = y_embed_audio.shape
    _, d_text = y_embed_text.shape
    C, d_total = fused_weight.shape
    assert d_audio == pos and d_audio + d_text == d_total

    # One-time wrapper-side split + transpose (done by XLA in HBM): the kernel
    # never slices or relayouts the weight.
    w_audio = fused_weight[:, :pos].T.astype(compute_dtype)          # (pos,    C)
    w_text = fused_weight[:, pos:].T.astype(compute_dtype)           # (d_text, C)

    # Lane-dense logits: pad the class dim (lane dim) to a multiple of 128.
    cp = _round_up(C, 128)
    if cp != C:
        w_audio = jnp.pad(w_audio, ((0, 0), (0, cp - C)))
        w_text = jnp.pad(w_text, ((0, 0), (0, cp - C)))

    ya = y_embed_audio.astype(compute_dtype)
    yt = y_embed_text.astype(compute_dtype)
    labels = y_true.astype(jnp.int32).reshape(-1, 1)                 # (B, 1)

    tb = min(batch_tile, _round_up(B, 8))
    pad = (-B) % tb
    if pad:  # pad batch to a tile multiple; padded rows carry label -1 (masked in-kernel)
        ya = jnp.pad(ya, ((0, pad), (0, 0)))
        yt = jnp.pad(yt, ((0, pad), (0, 0)))
        labels = jnp.pad(labels, ((0, pad), (0, 0)), constant_values=-1)
    n_steps = (B + pad) // tb

    kernel = functools.partial(_cls_fused_loss_kernel, num_classes=C)

    partials = pl.pallas_call(
        kernel,
        out_shape=jax.ShapeDtypeStruct((n_steps, 1), jnp.float32),
        grid=(n_steps,),
        in_specs=[
            pl.BlockSpec((tb, d_audio), lambda i: (i, 0)),
            pl.BlockSpec((tb, d_text), lambda i: (i, 0)),
            # Constant (0, 0) block index -> both weights stay VMEM-resident.
            # TODO(synk): pipeline_mode=pl.Buffered(1) on these two specs would
            # drop the unused second weight buffer (only matters on v7x 64 MiB).
            pl.BlockSpec((pos, cp), lambda i: (0, 0)),
            pl.BlockSpec((d_text, cp), lambda i: (0, 0)),
            pl.BlockSpec((tb, 1), lambda i: (i, 0)),
        ],
        # Each grid step owns its own scalar output block -> no carried
        # accumulator, so the batch axis is truly parallel (2 TCs on v7x).
        out_specs=pl.BlockSpec((1, 1), lambda i: (i, 0),
                               memory_space=pltpu.MemorySpace.SMEM),
        compiler_params=pltpu.CompilerParams(
            dimension_semantics=("parallel",),
            vmem_limit_bytes=48 * 1024 * 1024,
        ),
    )(ya, yt, w_audio, w_text, labels)

    # Single normalization: mean over the true batch, applied once for both heads.
    return jnp.sum(partials) * (1.0 / jnp.float32(B))


def _reference(y_embed_audio, y_embed_text, y_true, fused_weight, pos):
    """Plain-JAX reference (mirrors PyTorch CrossEntropyLoss mean reduction, f32)."""
    logits_a = y_embed_audio.astype(jnp.float32) @ fused_weight[:, :pos].astype(jnp.float32).T
    logits_t = y_embed_text.astype(jnp.float32) @ fused_weight[:, pos:].astype(jnp.float32).T

    def ce(logits, labels):
        logp = jax.nn.log_softmax(logits, axis=-1)
        return -jnp.mean(jnp.take_along_axis(logp, labels[:, None], axis=-1))

    return ce(logits_a, y_true) + ce(logits_t, y_true)


if __name__ == "__main__":
    B = 8            # batch
    POS = 32         # audio embedding dim (self.pos)
    DT = 48          # text embedding dim (asymmetric split to exercise the weight split)
    C = 16           # number of classes (fused_layer[0].weight out_features)

    key = jax.random.PRNGKey(0)
    k1, k2, k3, k4 = jax.random.split(key, 4)

    y_embed_audio = jax.random.normal(k1, (B, POS), dtype=jnp.float32)
    y_embed_text = jax.random.normal(k2, (B, DT), dtype=jnp.float32)
    y_true = jax.random.randint(k3, (B,), 0, C, dtype=jnp.int32)
    # deterministic init of model.fused_layer[0].weight: (C, POS + DT)
    fused_weight = jax.random.normal(k4, (C, POS + DT), dtype=jnp.float32) * 0.05

    loss = cls_fused_loss(y_embed_audio, y_embed_text, y_true, fused_weight, POS)
    jax.block_until_ready(loss)

    ref = _reference(y_embed_audio, y_embed_text, y_true, fused_weight, POS)
    # bf16 MXU operands (f32 accumulation) vs the f32 reference -> loose tolerance.
    assert jnp.allclose(loss, ref, rtol=2e-2, atol=2e-2), (loss, ref)

    print("KERNEL_OK")
</pallas_src>

<mosaic_0001>
module attributes {stable_mosaic.version = 11 : i64} {
  func.func @_cls_fused_loss_kernel(%arg0: i32, %arg1: memref<8x32xbf16, #tpu.memory_space<vmem>>, %arg2: memref<8x48xbf16, #tpu.memory_space<vmem>>, %arg3: memref<32x128xbf16, #tpu.memory_space<vmem>>, %arg4: memref<48x128xbf16, #tpu.memory_space<vmem>>, %arg5: memref<8x1xi32, #tpu.memory_space<vmem>>, %arg6: memref<1x1xf32, #tpu.memory_space<smem>>) attributes {dimension_semantics = [#tpu.dimension_semantics<parallel>], iteration_bounds = array<i64: 1>, scalar_prefetch = 0 : i64, scratch_operands = 0 : i64, tpu.core_type = #tpu.core_type<tc>, window_params = [{transform_indices = @transform_0, window_bounds = array<i64: 8, 32>}, {transform_indices = @transform_1, window_bounds = array<i64: 8, 48>}, {pipeline_mode = #tpu.pipeline_mode<synchronous>, transform_indices = @transform_2, window_bounds = array<i64: 32, 128>}, {pipeline_mode = #tpu.pipeline_mode<synchronous>, transform_indices = @transform_3, window_bounds = array<i64: 48, 128>}, {transform_indices = @transform_4, window_bounds = array<i64: 8, 1>}, {transform_indices = @transform_5, window_bounds = array<i64: 1, 1>}]} {
    %c0 = arith.constant 0 : index
    %c0_0 = arith.constant 0 : index
    %0 = vector.load %arg5[%c0, %c0_0] : memref<8x1xi32, #tpu.memory_space<vmem>>, vector<8x1xi32>
    %c0_i32 = arith.constant 0 : i32
    %1 = vector.broadcast %c0_i32 : i32 to vector<8x1xi32>
    %2 = arith.cmpi sge, %0, %1 : vector<8x1xi32>
    %3 = arith.extui %2 : vector<8x1xi1> to vector<8x1xi32>
    %4 = arith.sitofp %3 : vector<8x1xi32> to vector<8x1xf32>
    %c0_1 = arith.constant 0 : index
    %c0_2 = arith.constant 0 : index
    %5 = vector.load %arg1[%c0_1, %c0_2] : memref<8x32xbf16, #tpu.memory_space<vmem>>, vector<8x32xbf16>
    %c0_3 = arith.constant 0 : index
    %c0_4 = arith.constant 0 : index
    %6 = vector.load %arg3[%c0_3, %c0_4] : memref<32x128xbf16, #tpu.memory_space<vmem>>, vector<32x128xbf16>
    %cst = arith.constant dense<0.000000e+00> : vector<8x128xf32>
    %7 = tpu.matmul %5, %6, %cst {dimension_numbers = #tpu.dot_dimension_numbers<[1], [0], [0], [1], [0, 0, 1, 1], [], []>} : vector<8x32xbf16>, vector<32x128xbf16>, vector<8x128xf32> -> vector<8x128xf32>
    %8 = tpu.iota {dimensions = array<i32: 1>} : vector<8x128xi32>
    %c16_i32 = arith.constant 16 : i32
    %9 = vector.broadcast %c16_i32 : i32 to vector<8x128xi32>
    %10 = arith.cmpi slt, %8, %9 : vector<8x128xi32>
    %cst_5 = arith.constant 0xFF800000 : f32
    %11 = vector.broadcast %cst_5 : f32 to vector<8x128xf32>
    %12 = arith.select %10, %7, %11 : vector<8x128xi1>, vector<8x128xf32>
    %cst_6 = arith.constant dense<0xFF800000> : vector<8xf32>
    %13 = vector.multi_reduction <maximumf>, %12, %cst_6 [1] : vector<8x128xf32> to vector<8xf32>
    %14 = vector.shape_cast %13 : vector<8xf32> to vector<8x1xf32>
    %15 = vector.broadcast %14 : vector<8x1xf32> to vector<8x128xf32>
    %16 = arith.subf %12, %15 : vector<8x128xf32>
    %17 = math.exp %16 : vector<8x128xf32>
    %cst_7 = arith.constant dense<0.000000e+00> : vector<8xf32>
    %18 = vector.multi_reduction <add>, %17, %cst_7 [1] : vector<8x128xf32> to vector<8xf32>
    %19 = vector.shape_cast %18 : vector<8xf32> to vector<8x1xf32>
    %20 = math.log %19 : vector<8x1xf32>
    %21 = arith.addf %20, %14 : vector<8x1xf32>
    %22 = vector.broadcast %0 : vector<8x1xi32> to vector<8x128xi32>
    %23 = arith.cmpi eq, %8, %22 : vector<8x128xi32>
    %cst_8 = arith.constant 0.000000e+00 : f32
    %24 = vector.broadcast %cst_8 : f32 to vector<8x128xf32>
    %25 = arith.select %23, %12, %24 : vector<8x128xi1>, vector<8x128xf32>
    %cst_9 = arith.constant dense<0.000000e+00> : vector<8xf32>
    %26 = vector.multi_reduction <add>, %25, %cst_9 [1] : vector<8x128xf32> to vector<8xf32>
    %27 = vector.shape_cast %26 : vector<8xf32> to vector<8x1xf32>
    %28 = arith.subf %21, %27 : vector<8x1xf32>
    %29 = arith.mulf %28, %4 : vector<8x1xf32>
    %30 = vector.shape_cast %29 : vector<8x1xf32> to vector<1x8x1xf32>
    %cst_10 = arith.constant dense<0.000000e+00> : vector<1xf32>
    %31 = vector.multi_reduction <add>, %30, %cst_10 [1, 2] : vector<1x8x1xf32> to vector<1xf32>
    %32 = vector.shape_cast %31 : vector<1xf32> to vector<1x1x1xf32>
    %33 = vector.extract %32[0, 0, 0] : f32 from vector<1x1x1xf32>
    %c0_11 = arith.constant 0 : index
    %c0_12 = arith.constant 0 : index
    %34 = vector.load %arg2[%c0_11, %c0_12] : memref<8x48xbf16, #tpu.memory_space<vmem>>, vector<8x48xbf16>
    %c0_13 = arith.constant 0 : index
    %c0_14 = arith.constant 0 : index
    %35 = vector.load %arg4[%c0_13, %c0_14] : memref<48x128xbf16, #tpu.memory_space<vmem>>, vector<48x128xbf16>
    %cst_15 = arith.constant dense<0.000000e+00> : vector<8x128xf32>
    %36 = tpu.matmul %34, %35, %cst_15 {dimension_numbers = #tpu.dot_dimension_numbers<[1], [0], [0], [1], [0, 0, 1, 1], [], []>} : vector<8x48xbf16>, vector<48x128xbf16>, vector<8x128xf32> -> vector<8x128xf32>
    %37 = tpu.iota {dimensions = array<i32: 1>} : vector<8x128xi32>
    %c16_i32_16 = arith.constant 16 : i32
    %38 = vector.broadcast %c16_i32_16 : i32 to vector<8x128xi32>
    %39 = arith.cmpi slt, %37, %38 : vector<8x128xi32>
    %cst_17 = arith.constant 0xFF800000 : f32
    %40 = vector.broadcast %cst_17 : f32 to vector<8x128xf32>
    %41 = arith.select %39, %36, %40 : vector<8x128xi1>, vector<8x128xf32>
    %cst_18 = arith.constant dense<0xFF800000> : vector<8xf32>
    %42 = vector.multi_reduction <maximumf>, %41, %cst_18 [1] : vector<8x128xf32> to vector<8xf32>
    %43 = vector.shape_cast %42 : vector<8xf32> to vector<8x1xf32>
    %44 = vector.broadcast %43 : vector<8x1xf32> to vector<8x128xf32>
    %45 = arith.subf %41, %44 : vector<8x128xf32>
    %46 = math.exp %45 : vector<8x128xf32>
    %cst_19 = arith.constant dense<0.000000e+00> : vector<8xf32>
    %47 = vector.multi_reduction <add>, %46, %cst_19 [1] : vector<8x128xf32> to vector<8xf32>
    %48 = vector.shape_cast %47 : vector<8xf32> to vector<8x1xf32>
    %49 = math.log %48 : vector<8x1xf32>
    %50 = arith.addf %49, %43 : vector<8x1xf32>
    %51 = vector.broadcast %0 : vector<8x1xi32> to vector<8x128xi32>
    %52 = arith.cmpi eq, %37, %51 : vector<8x128xi32>
    %cst_20 = arith.constant 0.000000e+00 : f32
    %53 = vector.broadcast %cst_20 : f32 to vector<8x128xf32>
    %54 = arith.select %52, %41, %53 : vector<8x128xi1>, vector<8x128xf32>
    %cst_21 = arith.constant dense<0.000000e+00> : vector<8xf32>
    %55 = vector.multi_reduction <add>, %54, %cst_21 [1] : vector<8x128xf32> to vector<8xf32>
    %56 = vector.shape_cast %55 : vector<8xf32> to vector<8x1xf32>
    %57 = arith.subf %50, %56 : vector<8x1xf32>
    %58 = arith.mulf %57, %4 : vector<8x1xf32>
    %59 = vector.shape_cast %58 : vector<8x1xf32> to vector<1x8x1xf32>
    %cst_22 = arith.constant dense<0.000000e+00> : vector<1xf32>
    %60 = vector.multi_reduction <add>, %59, %cst_22 [1, 2] : vector<1x8x1xf32> to vector<1xf32>
    %61 = vector.shape_cast %60 : vector<1xf32> to vector<1x1x1xf32>
    %62 = vector.extract %61[0, 0, 0] : f32 from vector<1x1x1xf32>
    %63 = arith.addf %33, %62 : f32
    %c0_23 = arith.constant 0 : index
    %c0_24 = arith.constant 0 : index
    %64 = memref.load %arg6[%c0_23, %c0_24] : memref<1x1xf32, #tpu.memory_space<smem>>
    memref.store %63, %arg6[%c0_23, %c0_24] : memref<1x1xf32, #tpu.memory_space<smem>>
    return
  }
  func.func @transform_0(%arg0: i32) -> (i32, i32) {
    %c0_i32 = arith.constant 0 : i32
    %c0_i32_0 = arith.constant 0 : i32
    return %arg0, %c0_i32 : i32, i32
  }
  func.func @transform_1(%arg0: i32) -> (i32, i32) {
    %c0_i32 = arith.constant 0 : i32
    %c0_i32_0 = arith.constant 0 : i32
    return %arg0, %c0_i32 : i32, i32
  }
  func.func @transform_2(%arg0: i32) -> (i32, i32) {
    %c0_i32 = arith.constant 0 : i32
    %c0_i32_0 = arith.constant 0 : i32
    %c0_i32_1 = arith.constant 0 : i32
    return %c0_i32, %c0_i32_0 : i32, i32
  }
  func.func @transform_3(%arg0: i32) -> (i32, i32) {
    %c0_i32 = arith.constant 0 : i32
    %c0_i32_0 = arith.constant 0 : i32
    %c0_i32_1 = arith.constant 0 : i32
    return %c0_i32, %c0_i32_0 : i32, i32
  }
  func.func @transform_4(%arg0: i32) -> (i32, i32) {
    %c0_i32 = arith.constant 0 : i32
    %c0_i32_0 = arith.constant 0 : i32
    return %arg0, %c0_i32 : i32, i32
  }
  func.func @transform_5(%arg0: i32) -> (i32, i32) {
    %c0_i32 = arith.constant 0 : i32
    %c0_i32_0 = arith.constant 0 : i32
    return %arg0, %c0_i32 : i32, i32
  }
}

</mosaic_0001>

<llo_original>
// kernel: tpu_custom_call.1
$region0: #{tpu_custom_call.1}
  #allocation0 [shape = 'u32[]', space=smem, size = 0x4, offset = 0x4, fixed_abs, tag = 'smem constant byte address 0x4 - core index']
  #allocation1 [shape = 'u32[144,128]{1,0:T(1,128)}', space=vmem, size = 0x12000, scoped, tag = 'internal scratch']
  %s0 = inlined_call_operand.vmem [shape: bf16[8,32], index: 0, kind: input, shape index: {}]
  %s1 = inlined_call_operand.vmem [shape: bf16[8,48], index: 1, kind: input, shape index: {}]
  %s2 = inlined_call_operand.hbm [shape: bf16[32,128], index: 2, kind: input, shape index: {}]
  %s3 = inlined_call_operand.hbm [shape: bf16[48,128], index: 3, kind: input, shape index: {}]
  %s4 = inlined_call_operand.vmem [shape: s32[8,1], index: 4, kind: input, shape index: {}]
  %s5 = inlined_call_operand.hbm [shape: f32[1,1], index: 5, kind: output, shape index: {}]
  %s6 = sld [smem:[#allocation0]]
  $region38: #{tpu_custom_call.1} parent=0
    _
  %s8 = ssub.s32 1, %s6
  %s9 = scalar_select 0, %s8, %s6
  $region1: #{tpu_custom_call.1} parent=0
    #allocation2 [shape = 'u8[8192]{0}', space=vmem, size = 0x2000, scoped, tag = 'input window, operand 2, single buffered']
    #allocation3 [shape = 's32[1]{0}', space=sflag, size = 0x4, scoped, tag = 'scoped memory for tpu_custom_call.1']
    #allocation4 [shape = 's32[1]{0}', space=sflag, size = 0x4, scoped, tag = 'scoped memory for tpu_custom_call.1']
    #allocation5 [shape = 'u8[12288]{0}', space=vmem, size = 0x3000, scoped, tag = 'input window, operand 3, single buffered']
    #allocation6 [shape = 's32[1]{0}', space=sflag, size = 0x4, scoped, tag = 'scoped memory for tpu_custom_call.1']
    #allocation7 [shape = 'u8[512]{0}', space=smem, size = 0x200, scoped, tag = 'output window, operand 0, single buffered']
    %10 = vsyncpa [#allocation3], 0
    %11 = vsyncpa [#allocation6], 0
    %12 = vsyncpa [#allocation4], 0
    // Predicated region
    $region2: #{tpu_custom_call.1} parent=1 // pred_check
      _
    $region3: #{tpu_custom_call.1} parent=1 // pred_check_branch
      %14 = sbr.rel (0) target = $region5
    $region4: #{tpu_custom_call.1} parent=1 // pred_region
      _
    $region5: #{tpu_custom_call.1} parent=1 // pred_fallthru
      _
    // Predicated region
    $region6: #{tpu_custom_call.1} parent=1 // pred_check
      _
    $region7: #{tpu_custom_call.1} parent=1 // pred_check_branch
      %16 = sbr.rel (0) target = $region9
    $region8: #{tpu_custom_call.1} parent=1 // pred_region
      _
    $region9: #{tpu_custom_call.1} parent=1 // pred_fallthru
      _
    // Predicated region
    $region10: #{tpu_custom_call.1} parent=1 // pred_check
      _
    $region11: #{tpu_custom_call.1} parent=1 // pred_check_branch
      %18 = sbr.rel (0) target = $region13
    $region12: #{tpu_custom_call.1} parent=1 // pred_region
      %s20 = ssub.s32 256, 256
      %21 = vsyncadd [#allocation3], %s20
      %s22 = sshll.u32 [#allocation2], 4
      %s23 = int_to_ptr.vmem [resolvable:$true] %s22
      %28 = dma.hbm_to_vmem [thread:$0]  %s2, 256, %s23, [#allocation3], 64, 64, 4
    $region13: #{tpu_custom_call.1} parent=1 // pred_fallthru
      _
    // Predicated region
    $region14: #{tpu_custom_call.1} parent=1 // pred_check
      _
    $region15: #{tpu_custom_call.1} parent=1 // pred_check_branch
      %30 = sbr.rel (0) target = $region17
    $region16: #{tpu_custom_call.1} parent=1 // pred_region
      %s32 = ssub.s32 384, 384
      %33 = vsyncadd [#allocation6], %s32
      %s34 = sshll.u32 [#allocation5], 4
      %s35 = int_to_ptr.vmem [resolvable:$true] %s34
      %40 = dma.hbm_to_vmem [thread:$0]  %s3, 384, %s35, [#allocation6], 64, 64, 4
    $region17: #{tpu_custom_call.1} parent=1 // pred_fallthru
      _
    // Predicated region
    $region18: #{tpu_custom_call.1} parent=1 // pred_check
      _
    $region19: #{tpu_custom_call.1} parent=1 // pred_check_branch
      %42 = sbr.rel (0) target = $region21
    $region20: #{tpu_custom_call.1} parent=1 // pred_region
      _
    $region21: #{tpu_custom_call.1} parent=1 // pred_fallthru
      _
    // Predicated region
    $region22: #{tpu_custom_call.1} parent=1 // pred_check
      _
    $region23: #{tpu_custom_call.1} parent=1 // pred_check_branch
      %44 = sbr.rel (0) target = $region25
    $region24: #{tpu_custom_call.1} parent=1 // pred_region
      %45 = dma.done [#allocation3], 256
    $region25: #{tpu_custom_call.1} parent=1 // pred_fallthru
      _
    // Predicated region
    $region26: #{tpu_custom_call.1} parent=1 // pred_check
      _
    $region27: #{tpu_custom_call.1} parent=1 // pred_check_branch
      %47 = sbr.rel (0) target = $region29
    $region28: #{tpu_custom_call.1} parent=1 // pred_region
      %48 = dma.done [#allocation6], 384
    $region29: #{tpu_custom_call.1} parent=1 // pred_fallthru
      _
    %v50 = vld [vmem:[%s4] sm:$0xff]
    %vm51 = vcmp.ge.s32.totalorder %v50, 0
    %v52 = vsel %vm51, 1, 0
    %v53 = vcvt.s32.f32 %v52
    %v54 = vld [vmem:[%s0] sm:$0xf]
    %v55 = vld [vmem:[#allocation2] sm:$0xf]
    %v56 = vld [vmem:[#allocation2 + $0x4] sm:$0xf]
    %v57 = vld [vmem:[#allocation2 + $0x8] sm:$0xf]
    %v58 = vld [vmem:[#allocation2 + $0xc] sm:$0xf]
    %v63 = vunpack.c.l.b16 %v55
    %v64 = vunpack.c.l.b16 %v56
    %v65 = vunpack.c.l.b16 %v57
    %v66 = vunpack.c.l.b16 %v58
    %v67 = vpack.c.b16 %v64, %v63
    %v68 = vpack.c.b16 %v66, %v65
    %vm71 = vcmask 261120
    %v73 = vsel %vm71, %v54, 0
    %75 = vmatprep.subr.bf16.mxu0 0
    %76 = vmatpush1.bf16.msra.mxu0 0
    %77 = vmatprep.subr.bf16.mxu0 0
    %78 = vmatpush1.bf16.msra.mxu0 0
    %79 = vmatprep.subr.bf16.mxu0 0
    %80 = vmatpush1.bf16.msra.mxu0 0
    %81 = vmatprep.subr.bf16.mxu0 0
    %82 = vmatpush1.bf16.msra.mxu0 0
    %83 = vmatprep.subr.bf16.mxu0 0
    %84 = vmatpush1.bf16.msra.mxu0 0
    %85 = vmatprep.subr.bf16.mxu0 0
    %86 = vmatpush1.bf16.msra.mxu0 0
    %87 = vmatprep.subr.bf16.mxu0 0
    %88 = vmatpush1.bf16.msra.mxu0 %v68
    %89 = vmatprep.subr.bf16.mxu0 0
    %90 = vmatpush1.bf16.msra.mxu0 %v67
    %91 = vmatprep.subr.bf16.mxu0 0
    %92 = vmatpush2.bf16.msra.mxu0 0
    %93 = vmatprep.subr.bf16.mxu0 0
    %94 = vmatpush2.bf16.msra.mxu0 0
    %95 = vmatprep.subr.bf16.mxu0 0
    %96 = vmatpush2.bf16.msra.mxu0 0
    %97 = vmatprep.subr.bf16.mxu0 0
    %98 = vmatpush2.bf16.msra.mxu0 0
    %99 = vmatprep.subr.bf16.mxu0 0
    %100 = vmatpush2.bf16.msra.mxu0 0
    %101 = vmatprep.subr.bf16.mxu0 0
    %102 = vmatpush2.bf16.msra.mxu0 0
    %103 = vmatprep.subr.bf16.mxu0 0
    %104 = vmatpush2.bf16.msra.mxu0 0
    %105 = vmatprep.subr.bf16.mxu0 0
    %106 = vmatpush2.bf16.msra.mxu0 0
    %107 = vmatprep.mubr.bf16.mxu0 0
    %108 = vmatmul.mubr.bf16.gmra.mxu0 %v73
    %v109 = vpop.f32.mrf.mxu0
    %v110 = vadd.f32 0.0, %v109
    %v111 = vpop.f32.mrf.mxu0
    %v112 = vpop.f32.mrf.mxu0
    %v113 = vpop.f32.mrf.mxu0
    %114 = vdwg.mxu0
    %v115 = vlaneseq
    %v116 = vand.u32 %v115, 127
    %vm117 = vcmp.lt.s32.totalorder %v116, 16
    %v118 = vsel %vm117, %v110, -inf
    %119 = vmax.xlane.f32.xlu0 %v118
    %v120 = vpop.xlane.xlu0 %119
    %v121 = vsub.f32 %v118, %v120
    %v122 = vmul.f32 %v121, 1.442695
    %v123 = vpow.pop %v122
    %124 = vadd.xlane.f32.xlu0 %v123
    %v125 = vpop.xlane.xlu0 %124
    %v126 = vlog2.pop %v125
    %v127 = vmul.f32 %v126, 0.6931472
    %v128 = vadd.f32 %v127, %v120
    %129 = vset.pattern.permute.xlu0 0
    %130 = vperm.xlu0 %129, %v50
    %v131 = vpop.permute.xlu0 %130
    %vm132 = vcmp.eq.s32.totalorder %v116, %v131
    %v133 = vsel %vm132, %v118, 0.0
    %134 = vadd.xlane.f32.xlu0 %v133
    %v135 = vpop.xlane.xlu0 %134
    %v136 = vsub.f32 %v128, %v135
    %v137 = vmul.f32 %v136, %v53
    %vm138 = vcmask 7168
    %v139 = vsel %vm138, %v137, 0.0
    %140 = vadd.xlane.f32.xlu0 %v139
    %v141 = vpop.xlane.xlu0 %140
    %v142 = vrot.slane %v141, 4
    %v143 = vadd.f32 %v141, %v142
    %v144 = vrot.slane %v143, 2
    %v145 = vadd.f32 %v143, %v144
    %v146 = vrot.slane %v145, 1
    %v147 = vadd.f32 %v145, %v146
    %s148 = vtos %v147
    %v149 = vld [vmem:[%s1] sm:$0xf]
    %v150 = vld [vmem:[#allocation5] sm:$0xf]
    %v151 = vld [vmem:[#allocation5 + $0x4] sm:$0xf]
    %v152 = vld [vmem:[#allocation5 + $0x8] sm:$0xf]
    %v153 = vld [vmem:[#allocation5 + $0xc] sm:$0xf]
    %v154 = vld [vmem:[#allocation5 + $0x10] sm:$0xf]
    %v155 = vld [vmem:[#allocation5 + $0x14] sm:$0xf]
    %v162 = vunpack.c.l.b16 %v150
    %v163 = vunpack.c.l.b16 %v151
    %v164 = vunpack.c.l.b16 %v152
    %v165 = vunpack.c.l.b16 %v153
    %v166 = vunpack.c.l.b16 %v154
    %v167 = vunpack.c.l.b16 %v155
    %v168 = vpack.c.b16 %v163, %v162
    %v169 = vpack.c.b16 %v165, %v164
    %v170 = vpack.c.b16 %v167, %v166
    %vm174 = vcmask 392192
    %v176 = vsel %vm174, %v149, 0
    %178 = vmatprep.subr.bf16.mxu0 0
    %179 = vmatpush1.bf16.msra.mxu0 0
    %180 = vmatprep.subr.bf16.mxu0 0
    %181 = vmatpush1.bf16.msra.mxu0 0
    %182 = vmatprep.subr.bf16.mxu0 0
    %183 = vmatpush1.bf16.msra.mxu0 0
    %184 = vmatprep.subr.bf16.mxu0 0
    %185 = vmatpush1.bf16.msra.mxu0 0
    %186 = vmatprep.subr.bf16.mxu0 0
    %187 = vmatpush1.bf16.msra.mxu0 0
    %188 = vmatprep.subr.bf16.mxu0 0
    %189 = vmatpush1.bf16.msra.mxu0 %v170
    %190 = vmatprep.subr.bf16.mxu0 0
    %191 = vmatpush1.bf16.msra.mxu0 %v169
    %192 = vmatprep.subr.bf16.mxu0 0
    %193 = vmatpush1.bf16.msra.mxu0 %v168
    %194 = vmatprep.subr.bf16.mxu0 0
    %195 = vmatpush2.bf16.msra.mxu0 0
    %196 = vmatprep.subr.bf16.mxu0 0
    %197 = vmatpush2.bf16.msra.mxu0 0
    %198 = vmatprep.subr.bf16.mxu0 0
    %199 = vmatpush2.bf16.msra.mxu0 0
    %200 = vmatprep.subr.bf16.mxu0 0
    %201 = vmatpush2.bf16.msra.mxu0 0
    %202 = vmatprep.subr.bf16.mxu0 0
    %203 = vmatpush2.bf16.msra.mxu0 0
    %204 = vmatprep.subr.bf16.mxu0 0
    %205 = vmatpush2.bf16.msra.mxu0 0
    %206 = vmatprep.subr.bf16.mxu0 0
    %207 = vmatpush2.bf16.msra.mxu0 0
    %208 = vmatprep.subr.bf16.mxu0 0
    %209 = vmatpush2.bf16.msra.mxu0 0
    %210 = vmatprep.mubr.bf16.mxu0 0
    %211 = vmatmul.mubr.bf16.gmra.mxu0 %v176
    %v212 = vpop.f32.mrf.mxu0
    %v213 = vadd.f32 0.0, %v212
    %v214 = vpop.f32.mrf.mxu0
    %v215 = vpop.f32.mrf.mxu0
    %v216 = vpop.f32.mrf.mxu0
    %217 = vdwg.mxu0
    %v218 = vsel %vm117, %v213, -inf
    %219 = vmax.xlane.f32.xlu0 %v218
    %v220 = vpop.xlane.xlu0 %219
    %v221 = vsub.f32 %v218, %v220
    %v222 = vmul.f32 %v221, 1.442695
    %v223 = vpow.pop %v222
    %224 = vadd.xlane.f32.xlu0 %v223
    %v225 = vpop.xlane.xlu0 %224
    %v226 = vlog2.pop %v225
    %v227 = vmul.f32 %v226, 0.6931472
    %v228 = vadd.f32 %v227, %v220
    %v229 = vsel %vm132, %v218, 0.0
    %230 = vadd.xlane.f32.xlu0 %v229
    %v231 = vpop.xlane.xlu0 %230
    %v232 = vsub.f32 %v228, %v231
    %v233 = vmul.f32 %v232, %v53
    %v234 = vsel %vm138, %v233, 0.0
    %235 = vadd.xlane.f32.xlu0 %v234
    %v236 = vpop.xlane.xlu0 %235
    %v237 = vrot.slane %v236, 4
    %v238 = vadd.f32 %v236, %v237
    %v239 = vrot.slane %v238, 2
    %v240 = vadd.f32 %v238, %v239
    %v241 = vrot.slane %v240, 1
    %v242 = vadd.f32 %v240, %v241
    %s243 = vtos %v242
    %s244 = sadd.f32 %s148, %s243
    %s245 = scalar_lea.smem [#allocation7], 0
    %246 = sst [smem:[%s245]] %s244
    // Predicated region
    $region30: #{tpu_custom_call.1} parent=1 // pred_check
      _
    $region31: #{tpu_custom_call.1} parent=1 // pred_check_branch
      %248 = sbr.rel (0) target = $region33
    $region32: #{tpu_custom_call.1} parent=1 // pred_region
      %s250 = ssub.s32 16, 16
      %251 = vsyncadd [#allocation4], %s250
      %254 = dma.smem_to_hbm [#allocation7], 16, %s5, [#allocation4]
    $region33: #{tpu_custom_call.1} parent=1 // pred_fallthru
      _
    // Predicated region
    $region34: #{tpu_custom_call.1} parent=1 // pred_check
      _
    $region35: #{tpu_custom_call.1} parent=1 // pred_check_branch
      %256 = sbr.rel (0) target = $region37
    $region36: #{tpu_custom_call.1} parent=1 // pred_region
      %257 = dma.done [#allocation4], 16
    $region37: #{tpu_custom_call.1} parent=1 // pred_fallthru
      _
    %258 = sfence
    %259 = vsyncpa [#allocation3], 1
    %260 = vsyncpa [#allocation6], 1
    %261 = vsyncpa [#allocation4], 1

</llo_original>
